<compile_context>
chip_gen: v6e
topology: v6e:2x2x1
jax: 0.10.0
libtpu: 0.0.40
codegen_flags: <defaults>
</compile_context>

<pallas_src>
import jax
import jax.numpy as jnp
from jax.experimental import pallas as pl
from jax.experimental.pallas import tpu as pltpu

LOG_STD_MIN = -20.0
LOG_STD_MAX = 2.0
_HALF_LOG_2PI = 0.5 * float(jnp.log(2.0 * jnp.pi))


def _softplus(x):
    # numerically-stable softplus, same semantics as F.softplus
    return jnp.maximum(x, 0.0) + jnp.log1p(jnp.exp(-jnp.abs(x)))


def _hidden(obs, w1, b1, w2, b2):
    # Matmuls in the operand dtype (f32 or bf16), accumulate in f32 on the MXU.
    h = jnp.maximum(
        jnp.dot(obs, w1, preferred_element_type=jnp.float32) + b1, 0.0)
    h = jnp.maximum(
        jnp.dot(h.astype(w2.dtype), w2, preferred_element_type=jnp.float32) + b2, 0.0)
    return h


def actor_stochastic_kernel(obs_ref, w1_ref, b1_ref, w2_ref, b2_ref,
                            w3m_ref, b3m_ref, w3s_ref, b3s_ref, eps_ref,
                            a_ref, lp_ref):
    h = _hidden(obs_ref[...], w1_ref[...], b1_ref[...], w2_ref[...], b2_ref[...])
    hd = h.astype(w3m_ref.dtype)
    # two lane-aligned head matmuls (no out[:, :A]/out[:, A:] cross-lane slicing)
    mean = jnp.dot(hd, w3m_ref[...], preferred_element_type=jnp.float32) + b3m_ref[...]
    logstd = jnp.dot(hd, w3s_ref[...], preferred_element_type=jnp.float32) + b3s_ref[...]

    # soft clamping of log-std (matches the torch forward exactly)
    logstd = LOG_STD_MAX - _softplus(LOG_STD_MAX - logstd)
    logstd = LOG_STD_MIN + _softplus(logstd - LOG_STD_MIN)
    std = jnp.exp(logstd)

    eps = eps_ref[...]
    a = jnp.tanh(mean + std * eps)          # rsample + truncated action
    a_ref[...] = a

    # Normal(mean, std).log_prob(u) with u = mean + std*eps
    #   == -0.5*eps^2 - logstd - 0.5*log(2*pi)
    # fused with the tanh-squash correction to keep the live set small.
    lp = (-0.5 * eps * eps - logstd - _HALF_LOG_2PI
          - jnp.log(1.0 - a * a + 1e-6))
    lp_ref[...] = jnp.sum(lp, axis=-1, keepdims=True)


def actor_deterministic_kernel(obs_ref, w1_ref, b1_ref, w2_ref, b2_ref,
                               w3m_ref, b3m_ref, a_ref):
    h = _hidden(obs_ref[...], w1_ref[...], b1_ref[...], w2_ref[...], b2_ref[...])
    mean = jnp.dot(h.astype(w3m_ref.dtype), w3m_ref[...],
                   preferred_element_type=jnp.float32) + b3m_ref[...]
    a_ref[...] = jnp.tanh(mean)             # use_truncated_action=True


def _pick_block_b(B, max_tb=512):
    # whole batch if it already fits comfortably, otherwise 512-row blocks
    # (measured f32 streaming hits ~85% of HBM roofline at tile 512).
    return B if B <= max_tb else max_tb


def _bytes(*arrs):
    return int(sum(int(a.size) * a.dtype.itemsize for a in arrs))


def actor_forward(obs, params, eps=None, deterministic=False,
                  use_bf16=False, block_b=None):
    """Pallas implementation of ContinuousStochesticActor.forward."""
    w1, b1, w2, b2, w3, b3 = params
    B, obs_dim = obs.shape
    H1, H2 = w1.shape[1], w2.shape[1]
    A = w3.shape[1] // 2

    # split the combined [H, 2A] head into mean / logstd heads in the wrapper
    w3m, w3s = w3[:, :A], w3[:, A:]
    b3m, b3s = b3[:, :A], b3[:, A:]

    mm_dtype = jnp.bfloat16 if use_bf16 else jnp.float32
    obs_mm = obs.astype(mm_dtype)
    w1m, w2m = w1.astype(mm_dtype), w2.astype(mm_dtype)
    w3m_m, w3s_m = w3m.astype(mm_dtype), w3s.astype(mm_dtype)
    # biases, eps and the whole elementwise/EUP tail stay f32 (v5e-friendly)

    tb = block_b if block_b is not None else _pick_block_b(B)
    grid = (pl.cdiv(B, tb),)

    def batch_spec(feat):
        return pl.BlockSpec((tb, feat), lambda i: (i, 0))

    def resident(arr):
        return pl.BlockSpec(arr.shape, lambda i: (0, 0))

    cparams = pltpu.CompilerParams(
        dimension_semantics=("parallel",),       # megacore sharding on v7x
        vmem_limit_bytes=32 * 1024 * 1024,       # safe on v7x's 64 MiB VMEM
    )

    if deterministic:
        ce = pl.CostEstimate(
            flops=int(2 * B * (obs_dim * H1 + H1 * H2 + H2 * A)),
            transcendentals=int(B * A),
            bytes_accessed=_bytes(obs_mm, w1m, b1, w2m, b2, w3m_m, b3m) + B * A * 4,
        )
        a = pl.pallas_call(
            actor_deterministic_kernel,
            out_shape=jax.ShapeDtypeStruct((B, A), jnp.float32),
            grid=grid,
            in_specs=[batch_spec(obs_dim),
                      resident(w1m), resident(b1),
                      resident(w2m), resident(b2),
                      resident(w3m_m), resident(b3m)],
            out_specs=batch_spec(A),
            compiler_params=cparams,
            cost_estimate=ce,
        )(obs_mm, w1m, b1, w2m, b2, w3m_m, b3m)
        return a, None

    assert eps is not None, "stochastic path needs externally-sampled eps"
    ce = pl.CostEstimate(
        flops=int(2 * B * (obs_dim * H1 + H1 * H2 + H2 * 2 * A)),
        transcendentals=int(7 * B * A),
        bytes_accessed=(_bytes(obs_mm, w1m, b1, w2m, b2, w3m_m, b3m, w3s_m, b3s, eps)
                        + B * A * 4 + B * 4),
    )
    a, log_prob = pl.pallas_call(
        actor_stochastic_kernel,
        out_shape=(jax.ShapeDtypeStruct((B, A), jnp.float32),
                   jax.ShapeDtypeStruct((B, 1), jnp.float32)),
        grid=grid,
        in_specs=[batch_spec(obs_dim),
                  resident(w1m), resident(b1),
                  resident(w2m), resident(b2),
                  resident(w3m_m), resident(b3m),
                  resident(w3s_m), resident(b3s),
                  batch_spec(A)],
        out_specs=(batch_spec(A), batch_spec(1)),
        compiler_params=cparams,
        cost_estimate=ce,
    )(obs_mm, w1m, b1, w2m, b2, w3m_m, b3m, w3s_m, b3s, eps)
    return a, log_prob


def init_params(key, obs_dim, action_dim, hidden_dims):
    """Deterministic small-scale init of the MLP: obs_dim -> hidden -> 2*action_dim."""
    dims = [obs_dim] + list(hidden_dims) + [2 * action_dim]
    params = []
    for i in range(len(dims) - 1):
        key, wk = jax.random.split(key)
        w = (jax.random.normal(wk, (dims[i], dims[i + 1]), jnp.float32)
             / jnp.sqrt(dims[i]))
        b = jnp.zeros((1, dims[i + 1]), jnp.float32)
        params += [w, b]
    return tuple(params)


def actor_forward_ref(obs, params, eps):
    """Pure-JAX reference (mirrors the torch forward) for a sanity check."""
    w1, b1, w2, b2, w3, b3 = params
    h = jnp.maximum(obs @ w1 + b1, 0.0)
    h = jnp.maximum(h @ w2 + b2, 0.0)
    out = h @ w3 + b3
    A = out.shape[-1] // 2
    mean, logstd = out[:, :A], out[:, A:]
    logstd = LOG_STD_MAX - jax.nn.softplus(LOG_STD_MAX - logstd)
    logstd = LOG_STD_MIN + jax.nn.softplus(logstd - LOG_STD_MIN)
    std = jnp.exp(logstd)
    u = mean + std * eps
    a = jnp.tanh(u)
    lp = -0.5 * eps * eps - logstd - _HALF_LOG_2PI
    lp = lp - jnp.log(1.0 - a * a + 1e-6)
    return a, jnp.sum(lp, axis=-1, keepdims=True), jnp.tanh(mean)


if __name__ == "__main__":
    key = jax.random.PRNGKey(0)
    OBS_DIM, ACTION_DIM = 32, 8
    HIDDEN = [256, 256]            # module default hidden_dims

    key, k_par = jax.random.split(key)
    params = init_params(k_par, OBS_DIM, ACTION_DIM, HIDDEN)

    # --- small-batch check (single grid step) -------------------------------
    key, k_obs, k_eps = jax.random.split(key, 3)
    obs = jax.random.normal(k_obs, (4, OBS_DIM), jnp.float32)
    eps = jax.random.normal(k_eps, (4, ACTION_DIM), jnp.float32)

    a, log_prob = actor_forward(obs, params, eps=eps, deterministic=False)
    a = jax.block_until_ready(a)
    log_prob = jax.block_until_ready(log_prob)

    a_det, lp_det = actor_forward(obs, params, deterministic=True)
    a_det = jax.block_until_ready(a_det)
    assert lp_det is None

    a_ref, lp_ref, adet_ref = actor_forward_ref(obs, params, eps)
    assert jnp.allclose(a, a_ref, atol=2e-4, rtol=2e-4)
    assert jnp.allclose(log_prob, lp_ref, atol=1e-3, rtol=1e-3)
    assert jnp.allclose(a_det, adet_ref, atol=2e-4, rtol=2e-4)
    assert a.shape == (4, ACTION_DIM) and log_prob.shape == (4, 1)

    # --- larger batch exercising the batch-axis grid (2 x 512-row blocks) ---
    key, k_obs2, k_eps2 = jax.random.split(key, 3)
    B2 = 1024
    obs2 = jax.random.normal(k_obs2, (B2, OBS_DIM), jnp.float32)
    eps2 = jax.random.normal(k_eps2, (B2, ACTION_DIM), jnp.float32)

    a2, lp2 = actor_forward(obs2, params, eps=eps2, deterministic=False)
    a2 = jax.block_until_ready(a2)
    lp2 = jax.block_until_ready(lp2)
    a2_ref, lp2_ref, _ = actor_forward_ref(obs2, params, eps2)
    assert jnp.allclose(a2, a2_ref, atol=2e-4, rtol=2e-4)
    assert jnp.allclose(lp2, lp2_ref, atol=1e-3, rtol=1e-3)

    # --- bf16 matmul path (f32 tail) just needs to run and stay finite ------
    a3, lp3 = actor_forward(obs2, params, eps=eps2, deterministic=False,
                            use_bf16=True)
    a3 = jax.block_until_ready(a3)
    lp3 = jax.block_until_ready(lp3)
    assert a3.shape == (B2, ACTION_DIM) and lp3.shape == (B2, 1)
    assert bool(jnp.all(jnp.isfinite(a3))) and bool(jnp.all(jnp.isfinite(lp3)))

    print("KERNEL_OK")
</pallas_src>

<mosaic_0001>
module attributes {stable_mosaic.version = 11 : i64} {
  func.func @actor_stochastic_kernel(%arg0: i32, %arg1: memref<4x32xf32, #tpu.memory_space<vmem>>, %arg2: memref<32x256xf32, #tpu.memory_space<vmem>>, %arg3: memref<1x256xf32, #tpu.memory_space<vmem>>, %arg4: memref<256x256xf32, #tpu.memory_space<vmem>>, %arg5: memref<1x256xf32, #tpu.memory_space<vmem>>, %arg6: memref<256x8xf32, #tpu.memory_space<vmem>>, %arg7: memref<1x8xf32, #tpu.memory_space<vmem>>, %arg8: memref<256x8xf32, #tpu.memory_space<vmem>>, %arg9: memref<1x8xf32, #tpu.memory_space<vmem>>, %arg10: memref<4x8xf32, #tpu.memory_space<vmem>>, %arg11: memref<4x8xf32, #tpu.memory_space<vmem>>, %arg12: memref<4x1xf32, #tpu.memory_space<vmem>>) attributes {dimension_semantics = [#tpu.dimension_semantics<parallel>], iteration_bounds = array<i64: 1>, scalar_prefetch = 0 : i64, scratch_operands = 0 : i64, tpu.core_type = #tpu.core_type<tc>, window_params = [{transform_indices = @transform_0, window_bounds = array<i64: 4, 32>}, {pipeline_mode = #tpu.pipeline_mode<synchronous>, transform_indices = @transform_1, window_bounds = array<i64: 32, 256>}, {pipeline_mode = #tpu.pipeline_mode<synchronous>, transform_indices = @transform_2, window_bounds = array<i64: 1, 256>}, {pipeline_mode = #tpu.pipeline_mode<synchronous>, transform_indices = @transform_3, window_bounds = array<i64: 256, 256>}, {pipeline_mode = #tpu.pipeline_mode<synchronous>, transform_indices = @transform_4, window_bounds = array<i64: 1, 256>}, {pipeline_mode = #tpu.pipeline_mode<synchronous>, transform_indices = @transform_5, window_bounds = array<i64: 256, 8>}, {pipeline_mode = #tpu.pipeline_mode<synchronous>, transform_indices = @transform_6, window_bounds = array<i64: 1, 8>}, {pipeline_mode = #tpu.pipeline_mode<synchronous>, transform_indices = @transform_7, window_bounds = array<i64: 256, 8>}, {pipeline_mode = #tpu.pipeline_mode<synchronous>, transform_indices = @transform_8, window_bounds = array<i64: 1, 8>}, {transform_indices = @transform_9, window_bounds = array<i64: 4, 8>}, {transform_indices = @transform_10, window_bounds = array<i64: 4, 8>}, {transform_indices = @transform_11, window_bounds = array<i64: 4, 1>}]} {
    %c0 = arith.constant 0 : index
    %c0_0 = arith.constant 0 : index
    %0 = vector.load %arg1[%c0, %c0_0] : memref<4x32xf32, #tpu.memory_space<vmem>>, vector<4x32xf32>
    %c0_1 = arith.constant 0 : index
    %c0_2 = arith.constant 0 : index
    %1 = vector.load %arg2[%c0_1, %c0_2] : memref<32x256xf32, #tpu.memory_space<vmem>>, vector<32x256xf32>
    %c0_3 = arith.constant 0 : index
    %c0_4 = arith.constant 0 : index
    %2 = vector.load %arg3[%c0_3, %c0_4] : memref<1x256xf32, #tpu.memory_space<vmem>>, vector<1x256xf32>
    %c0_5 = arith.constant 0 : index
    %c0_6 = arith.constant 0 : index
    %3 = vector.load %arg4[%c0_5, %c0_6] : memref<256x256xf32, #tpu.memory_space<vmem>>, vector<256x256xf32>
    %c0_7 = arith.constant 0 : index
    %c0_8 = arith.constant 0 : index
    %4 = vector.load %arg5[%c0_7, %c0_8] : memref<1x256xf32, #tpu.memory_space<vmem>>, vector<1x256xf32>
    %cst = arith.constant dense<0.000000e+00> : vector<4x256xf32>
    %5 = tpu.matmul %0, %1, %cst {dimension_numbers = #tpu.dot_dimension_numbers<[1], [0], [0], [1], [0, 0, 1, 1], [], []>} : vector<4x32xf32>, vector<32x256xf32>, vector<4x256xf32> -> vector<4x256xf32>
    %6 = vector.broadcast %2 : vector<1x256xf32> to vector<4x256xf32>
    %7 = arith.addf %5, %6 : vector<4x256xf32>
    %cst_9 = arith.constant 0.000000e+00 : f32
    %8 = vector.broadcast %cst_9 : f32 to vector<4x256xf32>
    %9 = arith.maximumf %7, %8 : vector<4x256xf32>
    %cst_10 = arith.constant dense<0.000000e+00> : vector<4x256xf32>
    %10 = tpu.matmul %9, %3, %cst_10 {dimension_numbers = #tpu.dot_dimension_numbers<[1], [0], [0], [1], [0, 0, 1, 1], [], []>} : vector<4x256xf32>, vector<256x256xf32>, vector<4x256xf32> -> vector<4x256xf32>
    %11 = vector.broadcast %4 : vector<1x256xf32> to vector<4x256xf32>
    %12 = arith.addf %10, %11 : vector<4x256xf32>
    %cst_11 = arith.constant 0.000000e+00 : f32
    %13 = vector.broadcast %cst_11 : f32 to vector<4x256xf32>
    %14 = arith.maximumf %12, %13 : vector<4x256xf32>
    %c0_12 = arith.constant 0 : index
    %c0_13 = arith.constant 0 : index
    %15 = vector.load %arg6[%c0_12, %c0_13] : memref<256x8xf32, #tpu.memory_space<vmem>>, vector<256x8xf32>
    %cst_14 = arith.constant dense<0.000000e+00> : vector<4x8xf32>
    %16 = tpu.matmul %14, %15, %cst_14 {dimension_numbers = #tpu.dot_dimension_numbers<[1], [0], [0], [1], [0, 0, 1, 1], [], []>} : vector<4x256xf32>, vector<256x8xf32>, vector<4x8xf32> -> vector<4x8xf32>
    %c0_15 = arith.constant 0 : index
    %c0_16 = arith.constant 0 : index
    %17 = vector.load %arg7[%c0_15, %c0_16] : memref<1x8xf32, #tpu.memory_space<vmem>>, vector<1x8xf32>
    %18 = vector.broadcast %17 : vector<1x8xf32> to vector<4x8xf32>
    %19 = arith.addf %16, %18 : vector<4x8xf32>
    %c0_17 = arith.constant 0 : index
    %c0_18 = arith.constant 0 : index
    %20 = vector.load %arg8[%c0_17, %c0_18] : memref<256x8xf32, #tpu.memory_space<vmem>>, vector<256x8xf32>
    %cst_19 = arith.constant dense<0.000000e+00> : vector<4x8xf32>
    %21 = tpu.matmul %14, %20, %cst_19 {dimension_numbers = #tpu.dot_dimension_numbers<[1], [0], [0], [1], [0, 0, 1, 1], [], []>} : vector<4x256xf32>, vector<256x8xf32>, vector<4x8xf32> -> vector<4x8xf32>
    %c0_20 = arith.constant 0 : index
    %c0_21 = arith.constant 0 : index
    %22 = vector.load %arg9[%c0_20, %c0_21] : memref<1x8xf32, #tpu.memory_space<vmem>>, vector<1x8xf32>
    %23 = vector.broadcast %22 : vector<1x8xf32> to vector<4x8xf32>
    %24 = arith.addf %21, %23 : vector<4x8xf32>
    %cst_22 = arith.constant 2.000000e+00 : f32
    %25 = vector.broadcast %cst_22 : f32 to vector<4x8xf32>
    %26 = arith.subf %25, %24 : vector<4x8xf32>
    %cst_23 = arith.constant 0.000000e+00 : f32
    %27 = vector.broadcast %cst_23 : f32 to vector<4x8xf32>
    %28 = arith.maximumf %26, %27 : vector<4x8xf32>
    %29 = math.absf %26 : vector<4x8xf32>
    %cst_24 = arith.constant 0.000000e+00 : f32
    %30 = vector.broadcast %cst_24 : f32 to vector<4x8xf32>
    %31 = arith.subf %30, %29 : vector<4x8xf32>
    %32 = math.exp %31 : vector<4x8xf32>
    %33 = math.log1p %32 : vector<4x8xf32>
    %34 = arith.addf %28, %33 : vector<4x8xf32>
    %cst_25 = arith.constant 2.000000e+00 : f32
    %35 = vector.broadcast %cst_25 : f32 to vector<4x8xf32>
    %36 = arith.subf %35, %34 : vector<4x8xf32>
    %cst_26 = arith.constant -2.000000e+01 : f32
    %37 = vector.broadcast %cst_26 : f32 to vector<4x8xf32>
    %38 = arith.subf %36, %37 : vector<4x8xf32>
    %cst_27 = arith.constant 0.000000e+00 : f32
    %39 = vector.broadcast %cst_27 : f32 to vector<4x8xf32>
    %40 = arith.maximumf %38, %39 : vector<4x8xf32>
    %41 = math.absf %38 : vector<4x8xf32>
    %cst_28 = arith.constant 0.000000e+00 : f32
    %42 = vector.broadcast %cst_28 : f32 to vector<4x8xf32>
    %43 = arith.subf %42, %41 : vector<4x8xf32>
    %44 = math.exp %43 : vector<4x8xf32>
    %45 = math.log1p %44 : vector<4x8xf32>
    %46 = arith.addf %40, %45 : vector<4x8xf32>
    %cst_29 = arith.constant -2.000000e+01 : f32
    %47 = vector.broadcast %cst_29 : f32 to vector<4x8xf32>
    %48 = arith.addf %47, %46 : vector<4x8xf32>
    %49 = math.exp %48 : vector<4x8xf32>
    %c0_30 = arith.constant 0 : index
    %c0_31 = arith.constant 0 : index
    %50 = vector.load %arg10[%c0_30, %c0_31] : memref<4x8xf32, #tpu.memory_space<vmem>>, vector<4x8xf32>
    %51 = arith.mulf %49, %50 : vector<4x8xf32>
    %52 = arith.addf %19, %51 : vector<4x8xf32>
    %53 = math.tanh %52 : vector<4x8xf32>
    %c0_32 = arith.constant 0 : index
    %c0_33 = arith.constant 0 : index
    %54 = vector.load %arg11[%c0_32, %c0_33] : memref<4x8xf32, #tpu.memory_space<vmem>>, vector<4x8xf32>
    tpu.vector_store %arg11[%c0_32, %c0_33], %53 {strides = array<i32>} : memref<4x8xf32, #tpu.memory_space<vmem>>, vector<4x8xf32>,
    %cst_34 = arith.constant -5.000000e-01 : f32
    %55 = vector.broadcast %cst_34 : f32 to vector<4x8xf32>
    %56 = arith.mulf %55, %50 : vector<4x8xf32>
    %57 = arith.mulf %56, %50 : vector<4x8xf32>
    %58 = arith.subf %57, %48 : vector<4x8xf32>
    %cst_35 = arith.constant 0.918938517 : f32
    %59 = vector.broadcast %cst_35 : f32 to vector<4x8xf32>
    %60 = arith.subf %58, %59 : vector<4x8xf32>
    %61 = arith.mulf %53, %53 : vector<4x8xf32>
    %cst_36 = arith.constant 1.000000e+00 : f32
    %62 = vector.broadcast %cst_36 : f32 to vector<4x8xf32>
    %63 = arith.subf %62, %61 : vector<4x8xf32>
    %cst_37 = arith.constant 9.99999997E-7 : f32
    %64 = vector.broadcast %cst_37 : f32 to vector<4x8xf32>
    %65 = arith.addf %63, %64 : vector<4x8xf32>
    %66 = math.log %65 : vector<4x8xf32>
    %67 = arith.subf %60, %66 : vector<4x8xf32>
    %cst_38 = arith.constant dense<0.000000e+00> : vector<4xf32>
    %68 = vector.multi_reduction <add>, %67, %cst_38 [1] : vector<4x8xf32> to vector<4xf32>
    %69 = vector.shape_cast %68 : vector<4xf32> to vector<4x1xf32>
    %c0_39 = arith.constant 0 : index
    %c0_40 = arith.constant 0 : index
    %70 = vector.load %arg12[%c0_39, %c0_40] : memref<4x1xf32, #tpu.memory_space<vmem>>, vector<4x1xf32>
    tpu.vector_store %arg12[%c0_39, %c0_40], %69 {strides = array<i32>} : memref<4x1xf32, #tpu.memory_space<vmem>>, vector<4x1xf32>,
    return
  }
  func.func @transform_0(%arg0: i32) -> (i32, i32) {
    %c0_i32 = arith.constant 0 : i32
    %c0_i32_0 = arith.constant 0 : i32
    return %arg0, %c0_i32 : i32, i32
  }
  func.func @transform_1(%arg0: i32) -> (i32, i32) {
    %c0_i32 = arith.constant 0 : i32
    %c0_i32_0 = arith.constant 0 : i32
    %c0_i32_1 = arith.constant 0 : i32
    return %c0_i32, %c0_i32_0 : i32, i32
  }
  func.func @transform_2(%arg0: i32) -> (i32, i32) {
    %c0_i32 = arith.constant 0 : i32
    %c0_i32_0 = arith.constant 0 : i32
    %c0_i32_1 = arith.constant 0 : i32
    return %c0_i32, %c0_i32_0 : i32, i32
  }
  func.func @transform_3(%arg0: i32) -> (i32, i32) {
    %c0_i32 = arith.constant 0 : i32
    %c0_i32_0 = arith.constant 0 : i32
    %c0_i32_1 = arith.constant 0 : i32
    return %c0_i32, %c0_i32_0 : i32, i32
  }
  func.func @transform_4(%arg0: i32) -> (i32, i32) {
    %c0_i32 = arith.constant 0 : i32
    %c0_i32_0 = arith.constant 0 : i32
    %c0_i32_1 = arith.constant 0 : i32
    return %c0_i32, %c0_i32_0 : i32, i32
  }
  func.func @transform_5(%arg0: i32) -> (i32, i32) {
    %c0_i32 = arith.constant 0 : i32
    %c0_i32_0 = arith.constant 0 : i32
    %c0_i32_1 = arith.constant 0 : i32
    return %c0_i32, %c0_i32_0 : i32, i32
  }
  func.func @transform_6(%arg0: i32) -> (i32, i32) {
    %c0_i32 = arith.constant 0 : i32
    %c0_i32_0 = arith.constant 0 : i32
    %c0_i32_1 = arith.constant 0 : i32
    return %c0_i32, %c0_i32_0 : i32, i32
  }
  func.func @transform_7(%arg0: i32) -> (i32, i32) {
    %c0_i32 = arith.constant 0 : i32
    %c0_i32_0 = arith.constant 0 : i32
    %c0_i32_1 = arith.constant 0 : i32
    return %c0_i32, %c0_i32_0 : i32, i32
  }
  func.func @transform_8(%arg0: i32) -> (i32, i32) {
    %c0_i32 = arith.constant 0 : i32
    %c0_i32_0 = arith.constant 0 : i32
    %c0_i32_1 = arith.constant 0 : i32
    return %c0_i32, %c0_i32_0 : i32, i32
  }
  func.func @transform_9(%arg0: i32) -> (i32, i32) {
    %c0_i32 = arith.constant 0 : i32
    %c0_i32_0 = arith.constant 0 : i32
    return %arg0, %c0_i32 : i32, i32
  }
  func.func @transform_10(%arg0: i32) -> (i32, i32) {
    %c0_i32 = arith.constant 0 : i32
    %c0_i32_0 = arith.constant 0 : i32
    return %arg0, %c0_i32 : i32, i32
  }
  func.func @transform_11(%arg0: i32) -> (i32, i32) {
    %c0_i32 = arith.constant 0 : i32
    %c0_i32_0 = arith.constant 0 : i32
    return %arg0, %c0_i32 : i32, i32
  }
}

</mosaic_0001>

<llo_original>
// kernel: tpu_custom_call.1
$region0: #{tpu_custom_call.1}
  #allocation0 [shape = 'u32[]', space=smem, size = 0x4, offset = 0x4, fixed_abs, tag = 'smem constant byte address 0x4 - core index']
  #allocation1 [shape = 'u32[144,128]{1,0:T(1,128)}', space=vmem, size = 0x12000, scoped, tag = 'internal scratch']
  %s0 = inlined_call_operand.vmem [shape: f32[4,32], index: 0, kind: input, shape index: {}]
  %s1 = inlined_call_operand.hbm [shape: f32[32,256], index: 1, kind: input, shape index: {}]
  %s2 = inlined_call_operand.vmem [shape: f32[1,256], index: 2, kind: input, shape index: {}]
  %s3 = inlined_call_operand.vmem [shape: f32[256,256], index: 3, kind: input, shape index: {}]
  %s4 = inlined_call_operand.vmem [shape: f32[1,256], index: 4, kind: input, shape index: {}]
  %s5 = inlined_call_operand.vmem [shape: f32[256,8], index: 5, kind: input, shape index: {}]
  %s6 = inlined_call_operand.vmem [shape: f32[1,8], index: 6, kind: input, shape index: {}]
  %s7 = inlined_call_operand.vmem [shape: f32[256,8], index: 7, kind: input, shape index: {}]
  %s8 = inlined_call_operand.vmem [shape: f32[1,8], index: 8, kind: input, shape index: {}]
  %s9 = inlined_call_operand.vmem [shape: f32[4,8], index: 9, kind: input, shape index: {}]
  %s10 = inlined_call_operand.hbm [shape: f32[4,8], index: 10, kind: output, shape index: {0}]
  %s11 = inlined_call_operand.vmem [shape: f32[4,1], index: 11, kind: output, shape index: {1}]
  %12 = xla_tuple %s10, %s11
  %s13 = sld [smem:[#allocation0]]
  $region62: #{tpu_custom_call.1} parent=0
    _
  %s15 = ssub.s32 1, %s13
  %s16 = scalar_select 0, %s15, %s13
  $region1: #{tpu_custom_call.1} parent=0
    #allocation2 [shape = 'u8[32768]{0}', space=vmem, size = 0x8000, scoped, tag = 'input window, operand 1, single buffered']
    #allocation3 [shape = 's32[1]{0}', space=sflag, size = 0x4, scoped, tag = 'scoped memory for tpu_custom_call.1']
    #allocation4 [shape = 's32[1]{0}', space=sflag, size = 0x4, scoped, tag = 'scoped memory for tpu_custom_call.1']
    #allocation5 [shape = 'u8[2048]{0}', space=vmem, size = 0x800, scoped, tag = 'output window, operand 0, single buffered']
    %17 = vsyncpa [#allocation3], 0
    %18 = vsyncpa [#allocation4], 0
    // Predicated region
    $region2: #{tpu_custom_call.1} parent=1 // pred_check
      _
    $region3: #{tpu_custom_call.1} parent=1 // pred_check_branch
      %20 = sbr.rel (0) target = $region5
    $region4: #{tpu_custom_call.1} parent=1 // pred_region
      _
    $region5: #{tpu_custom_call.1} parent=1 // pred_fallthru
      _
    // Predicated region
    $region6: #{tpu_custom_call.1} parent=1 // pred_check
      _
    $region7: #{tpu_custom_call.1} parent=1 // pred_check_branch
      %22 = sbr.rel (0) target = $region9
    $region8: #{tpu_custom_call.1} parent=1 // pred_region
      %s24 = ssub.s32 1024, 1024
      %25 = vsyncadd [#allocation3], %s24
      %s26 = sshll.u32 [#allocation2], 4
      %s27 = int_to_ptr.vmem [resolvable:$true] %s26
      %32 = dma.hbm_to_vmem [thread:$0]  %s1, 1024, %s27, [#allocation3], 256, 256, 16
    $region9: #{tpu_custom_call.1} parent=1 // pred_fallthru
      _
    // Predicated region
    $region10: #{tpu_custom_call.1} parent=1 // pred_check
      _
    $region11: #{tpu_custom_call.1} parent=1 // pred_check_branch
      %34 = sbr.rel (0) target = $region13
    $region12: #{tpu_custom_call.1} parent=1 // pred_region
      _
    $region13: #{tpu_custom_call.1} parent=1 // pred_fallthru
      _
    // Predicated region
    $region14: #{tpu_custom_call.1} parent=1 // pred_check
      _
    $region15: #{tpu_custom_call.1} parent=1 // pred_check_branch
      %36 = sbr.rel (0) target = $region17
    $region16: #{tpu_custom_call.1} parent=1 // pred_region
      _
    $region17: #{tpu_custom_call.1} parent=1 // pred_fallthru
      _
    // Predicated region
    $region18: #{tpu_custom_call.1} parent=1 // pred_check
      _
    $region19: #{tpu_custom_call.1} parent=1 // pred_check_branch
      %38 = sbr.rel (0) target = $region21
    $region20: #{tpu_custom_call.1} parent=1 // pred_region
      _
    $region21: #{tpu_custom_call.1} parent=1 // pred_fallthru
      _
    // Predicated region
    $region22: #{tpu_custom_call.1} parent=1 // pred_check
      _
    $region23: #{tpu_custom_call.1} parent=1 // pred_check_branch
      %40 = sbr.rel (0) target = $region25
    $region24: #{tpu_custom_call.1} parent=1 // pred_region
      _
    $region25: #{tpu_custom_call.1} parent=1 // pred_fallthru
      _
    // Predicated region
    $region26: #{tpu_custom_call.1} parent=1 // pred_check
      _
    $region27: #{tpu_custom_call.1} parent=1 // pred_check_branch
      %42 = sbr.rel (0) target = $region29
    $region28: #{tpu_custom_call.1} parent=1 // pred_region
      _
    $region29: #{tpu_custom_call.1} parent=1 // pred_fallthru
      _
    // Predicated region
    $region30: #{tpu_custom_call.1} parent=1 // pred_check
      _
    $region31: #{tpu_custom_call.1} parent=1 // pred_check_branch
      %44 = sbr.rel (0) target = $region33
    $region32: #{tpu_custom_call.1} parent=1 // pred_region
      _
    $region33: #{tpu_custom_call.1} parent=1 // pred_fallthru
      _
    // Predicated region
    $region34: #{tpu_custom_call.1} parent=1 // pred_check
      _
    $region35: #{tpu_custom_call.1} parent=1 // pred_check_branch
      %46 = sbr.rel (0) target = $region37
    $region36: #{tpu_custom_call.1} parent=1 // pred_region
      _
    $region37: #{tpu_custom_call.1} parent=1 // pred_fallthru
      _
    // Predicated region
    $region38: #{tpu_custom_call.1} parent=1 // pred_check
      _
    $region39: #{tpu_custom_call.1} parent=1 // pred_check_branch
      %48 = sbr.rel (0) target = $region41
    $region40: #{tpu_custom_call.1} parent=1 // pred_region
      _
    $region41: #{tpu_custom_call.1} parent=1 // pred_fallthru
      _
    // Predicated region
    $region42: #{tpu_custom_call.1} parent=1 // pred_check
      _
    $region43: #{tpu_custom_call.1} parent=1 // pred_check_branch
      %50 = sbr.rel (0) target = $region45
    $region44: #{tpu_custom_call.1} parent=1 // pred_region
      %51 = dma.done [#allocation3], 1024
    $region45: #{tpu_custom_call.1} parent=1 // pred_fallthru
      _
    %v52 = vld [vmem:[%s0] sm:$0xf]
    %v53 = vld [vmem:[#allocation2] sm:$0xff]
    %v54 = vld [vmem:[#allocation2 + $0x8] sm:$0xff]
    %v55 = vld [vmem:[#allocation2 + $0x10] sm:$0xff]
    %v56 = vld [vmem:[#allocation2 + $0x18] sm:$0xff]
    %v57 = vld [vmem:[#allocation2 + $0x20] sm:$0xff]
    %v58 = vld [vmem:[#allocation2 + $0x28] sm:$0xff]
    %v59 = vld [vmem:[#allocation2 + $0x30] sm:$0xff]
    %v60 = vld [vmem:[#allocation2 + $0x38] sm:$0xff]
    %v61 = vld [vmem:[%s2] sm:$0x3]
    %v62 = vld [vmem:[%s3] sm:$0xff]
    %v63 = vld [vmem:[%s3 + $0x8] sm:$0xff]
    %v64 = vld [vmem:[%s3 + $0x10] sm:$0xff]
    %v65 = vld [vmem:[%s3 + $0x18] sm:$0xff]
    %v66 = vld [vmem:[%s3 + $0x20] sm:$0xff]
    %v67 = vld [vmem:[%s3 + $0x28] sm:$0xff]
    %v68 = vld [vmem:[%s3 + $0x30] sm:$0xff]
    %v69 = vld [vmem:[%s3 + $0x38] sm:$0xff]
    %v70 = vld [vmem:[%s3 + $0x40] sm:$0xff]
    %v71 = vld [vmem:[%s3 + $0x48] sm:$0xff]
    %v72 = vld [vmem:[%s3 + $0x50] sm:$0xff]
    %v73 = vld [vmem:[%s3 + $0x58] sm:$0xff]
    %v74 = vld [vmem:[%s3 + $0x60] sm:$0xff]
    %v75 = vld [vmem:[%s3 + $0x68] sm:$0xff]
    %v76 = vld [vmem:[%s3 + $0x70] sm:$0xff]
    %v77 = vld [vmem:[%s3 + $0x78] sm:$0xff]
    %v78 = vld [vmem:[%s3 + $0x80] sm:$0xff]
    %v79 = vld [vmem:[%s3 + $0x88] sm:$0xff]
    %v80 = vld [vmem:[%s3 + $0x90] sm:$0xff]
    %v81 = vld [vmem:[%s3 + $0x98] sm:$0xff]
    %v82 = vld [vmem:[%s3 + $0xa0] sm:$0xff]
    %v83 = vld [vmem:[%s3 + $0xa8] sm:$0xff]
    %v84 = vld [vmem:[%s3 + $0xb0] sm:$0xff]
    %v85 = vld [vmem:[%s3 + $0xb8] sm:$0xff]
    %v86 = vld [vmem:[%s3 + $0xc0] sm:$0xff]
    %v87 = vld [vmem:[%s3 + $0xc8] sm:$0xff]
    %v88 = vld [vmem:[%s3 + $0xd0] sm:$0xff]
    %v89 = vld [vmem:[%s3 + $0xd8] sm:$0xff]
    %v90 = vld [vmem:[%s3 + $0xe0] sm:$0xff]
    %v91 = vld [vmem:[%s3 + $0xe8] sm:$0xff]
    %v92 = vld [vmem:[%s3 + $0xf0] sm:$0xff]
    %v93 = vld [vmem:[%s3 + $0xf8] sm:$0xff]
    %v94 = vld [vmem:[%s3 + $0x100] sm:$0xff]
    %v95 = vld [vmem:[%s3 + $0x108] sm:$0xff]
    %v96 = vld [vmem:[%s3 + $0x110] sm:$0xff]
    %v97 = vld [vmem:[%s3 + $0x118] sm:$0xff]
    %v98 = vld [vmem:[%s3 + $0x120] sm:$0xff]
    %v99 = vld [vmem:[%s3 + $0x128] sm:$0xff]
    %v100 = vld [vmem:[%s3 + $0x130] sm:$0xff]
    %v101 = vld [vmem:[%s3 + $0x138] sm:$0xff]
    %v102 = vld [vmem:[%s3 + $0x140] sm:$0xff]
    %v103 = vld [vmem:[%s3 + $0x148] sm:$0xff]
    %v104 = vld [vmem:[%s3 + $0x150] sm:$0xff]
    %v105 = vld [vmem:[%s3 + $0x158] sm:$0xff]
    %v106 = vld [vmem:[%s3 + $0x160] sm:$0xff]
    %v107 = vld [vmem:[%s3 + $0x168] sm:$0xff]
    %v108 = vld [vmem:[%s3 + $0x170] sm:$0xff]
    %v109 = vld [vmem:[%s3 + $0x178] sm:$0xff]
    %v110 = vld [vmem:[%s3 + $0x180] sm:$0xff]
    %v111 = vld [vmem:[%s3 + $0x188] sm:$0xff]
    %v112 = vld [vmem:[%s3 + $0x190] sm:$0xff]
    %v113 = vld [vmem:[%s3 + $0x198] sm:$0xff]
    %v114 = vld [vmem:[%s3 + $0x1a0] sm:$0xff]
    %v115 = vld [vmem:[%s3 + $0x1a8] sm:$0xff]
    %v116 = vld [vmem:[%s3 + $0x1b0] sm:$0xff]
    %v117 = vld [vmem:[%s3 + $0x1b8] sm:$0xff]
    %v118 = vld [vmem:[%s3 + $0x1c0] sm:$0xff]
    %v119 = vld [vmem:[%s3 + $0x1c8] sm:$0xff]
    %v120 = vld [vmem:[%s3 + $0x1d0] sm:$0xff]
    %v121 = vld [vmem:[%s3 + $0x1d8] sm:$0xff]
    %v122 = vld [vmem:[%s3 + $0x1e0] sm:$0xff]
    %v123 = vld [vmem:[%s3 + $0x1e8] sm:$0xff]
    %v124 = vld [vmem:[%s3 + $0x1f0] sm:$0xff]
    %v125 = vld [vmem:[%s3 + $0x1f8] sm:$0xff]
    %v126 = vld [vmem:[%s4] sm:$0x3]
    %v128 = vlaneseq
    %v129 = vshrl.u32 %v128, 7
    %v130 = vsub.s32 0, %v129
    %v131 = vrot.slane %v61, %v130
    %v132 = vlaneseq
    %v133 = vshrl.u32 %v132, 7
    %v134 = vsub.s32 1, %v133
    %v135 = vrot.slane %v61, %v134
    %vm138 = vcmask 261120
    %v140 = vsel %vm138, %v52, 0
    %142 = vmatprep.subr.mxu0 0.0
    %143 = vmatpush1.msra.mxu0 0.0
    %144 = vmatprep.subr.mxu0 0.0
    %145 = vmatpush1.msra.mxu0 0.0
    %146 = vmatprep.subr.mxu0 0.0
    %147 = vmatpush1.msra.mxu0 0.0
    %148 = vmatprep.subr.mxu0 0.0
    %149 = vmatpush1.msra.mxu0 0.0
    %150 = vmatprep.subr.mxu0 0.0
    %151 = vmatpush1.msra.mxu0 0.0
    %152 = vmatprep.subr.mxu0 0.0
    %153 = vmatpush1.msra.mxu0 0.0
    %154 = vmatprep.subr.mxu0 0.0
    %155 = vmatpush1.msra.mxu0 0.0
    %156 = vmatprep.subr.mxu0 0.0
    %157 = vmatpush1.msra.mxu0 0.0
    %158 = vmatprep.subr.mxu0 0.0
    %159 = vmatpush1.msra.mxu0 0.0
    %160 = vmatprep.subr.mxu0 0.0
    %161 = vmatpush1.msra.mxu0 0.0
    %162 = vmatprep.subr.mxu0 0.0
    %163 = vmatpush1.msra.mxu0 0.0
    %164 = vmatprep.subr.mxu0 0.0
    %165 = vmatpush1.msra.mxu0 0.0
    %166 = vmatprep.subr.mxu0 %v60
    %167 = vmatpush1.msra.mxu0 %v59
    %168 = vmatprep.subr.mxu0 %v58
    %169 = vmatpush1.msra.mxu0 %v57
    %170 = vmatprep.subr.mxu0 %v56
    %171 = vmatpush1.msra.mxu0 %v55
    %172 = vmatprep.subr.mxu0 %v54
    %173 = vmatpush1.msra.mxu0 %v53
    %174 = vmatprep.subr.mxu0 0.0
    %175 = vmatpush2.msra.mxu0 0.0
    %176 = vmatprep.subr.mxu0 0.0
    %177 = vmatpush2.msra.mxu0 0.0
    %178 = vmatprep.subr.mxu0 0.0
    %179 = vmatpush2.msra.mxu0 0.0
    %180 = vmatprep.subr.mxu0 0.0
    %181 = vmatpush2.msra.mxu0 0.0
    %182 = vmatprep.subr.mxu0 0.0
    %183 = vmatpush2.msra.mxu0 0.0
    %184 = vmatprep.subr.mxu0 0.0
    %185 = vmatpush2.msra.mxu0 0.0
    %186 = vmatprep.subr.mxu0 0.0
    %187 = vmatpush2.msra.mxu0 0.0
    %188 = vmatprep.subr.mxu0 0.0
    %189 = vmatpush2.msra.mxu0 0.0
    %190 = vmatprep.subr.mxu0 0.0
    %191 = vmatpush2.msra.mxu0 0.0
    %192 = vmatprep.subr.mxu0 0.0
    %193 = vmatpush2.msra.mxu0 0.0
    %194 = vmatprep.subr.mxu0 0.0
    %195 = vmatpush2.msra.mxu0 0.0
    %196 = vmatprep.subr.mxu0 0.0
    %197 = vmatpush2.msra.mxu0 0.0
    %198 = vmatprep.subr.mxu0 0.0
    %199 = vmatpush2.msra.mxu0 0.0
    %200 = vmatprep.subr.mxu0 0.0
    %201 = vmatpush2.msra.mxu0 0.0
    %202 = vmatprep.subr.mxu0 0.0
    %203 = vmatpush2.msra.mxu0 0.0
    %204 = vmatprep.subr.mxu0 0.0
    %205 = vmatpush2.msra.mxu0 0.0
    %206 = vmatprep.mubr.f32.mxu0 0.0
    %207 = vmatmul.mubr.f32.gmra.mxu0 %v140
    %v208 = vpop.f32.mrf.mxu0
    %v209 = vadd.f32 %v131, %v208
    %v210 = vpop.f32.mrf.mxu0
    %v211 = vadd.f32 %v135, %v210
    %212 = vdwg.mxu0
    %v213 = vmax.f32 %v209, 0.0
    %v214 = vmax.f32 %v211, 0.0
    %v216 = vlaneseq
    %v217 = vshrl.u32 %v216, 7
    %v218 = vsub.s32 0, %v217
    %v219 = vrot.slane %v126, %v218
    %v220 = vlaneseq
    %v221 = vshrl.u32 %v220, 7
    %v222 = vsub.s32 1, %v221
    %v223 = vrot.slane %v126, %v222
    %226 = vmatprep.subr.mxu0 %v93
    %227 = vmatpush1.msra.mxu0 %v92
    %228 = vmatprep.subr.mxu0 %v91
    %229 = vmatpush1.msra.mxu0 %v90
    %230 = vmatprep.subr.mxu0 %v89
    %231 = vmatpush1.msra.mxu0 %v88
    %232 = vmatprep.subr.mxu0 %v87
    %233 = vmatpush1.msra.mxu0 %v86
    %234 = vmatprep.subr.mxu0 %v85
    %235 = vmatpush1.msra.mxu0 %v84
    %236 = vmatprep.subr.mxu0 %v83
    %237 = vmatpush1.msra.mxu0 %v82
    %238 = vmatprep.subr.mxu0 %v81
    %239 = vmatpush1.msra.mxu0 %v80
    %240 = vmatprep.subr.mxu0 %v79
    %241 = vmatpush1.msra.mxu0 %v78
    %242 = vmatprep.subr.mxu0 %v77
    %243 = vmatpush1.msra.mxu0 %v76
    %244 = vmatprep.subr.mxu0 %v75
    %245 = vmatpush1.msra.mxu0 %v74
    %246 = vmatprep.subr.mxu0 %v73
    %247 = vmatpush1.msra.mxu0 %v72
    %248 = vmatprep.subr.mxu0 %v71
    %249 = vmatpush1.msra.mxu0 %v70
    %250 = vmatprep.subr.mxu0 %v69
    %251 = vmatpush1.msra.mxu0 %v68
    %252 = vmatprep.subr.mxu0 %v67
    %253 = vmatpush1.msra.mxu0 %v66
    %254 = vmatprep.subr.mxu0 %v65
    %255 = vmatpush1.msra.mxu0 %v64
    %256 = vmatprep.subr.mxu0 %v63
    %257 = vmatpush1.msra.mxu0 %v62
    %258 = vmatprep.subr.mxu0 %v125
    %259 = vmatpush2.msra.mxu0 %v124
    %260 = vmatprep.subr.mxu0 %v123
    %261 = vmatpush2.msra.mxu0 %v122
    %262 = vmatprep.subr.mxu0 %v121
    %263 = vmatpush2.msra.mxu0 %v120
    %264 = vmatprep.subr.mxu0 %v119
    %265 = vmatpush2.msra.mxu0 %v118
    %266 = vmatprep.subr.mxu0 %v117
    %267 = vmatpush2.msra.mxu0 %v116
    %268 = vmatprep.subr.mxu0 %v115
    %269 = vmatpush2.msra.mxu0 %v114
    %270 = vmatprep.subr.mxu0 %v113
    %271 = vmatpush2.msra.mxu0 %v112
    %272 = vmatprep.subr.mxu0 %v111
    %273 = vmatpush2.msra.mxu0 %v110
    %274 = vmatprep.subr.mxu0 %v109
    %275 = vmatpush2.msra.mxu0 %v108
    %276 = vmatprep.subr.mxu0 %v107
    %277 = vmatpush2.msra.mxu0 %v106
    %278 = vmatprep.subr.mxu0 %v105
    %279 = vmatpush2.msra.mxu0 %v104
    %280 = vmatprep.subr.mxu0 %v103
    %281 = vmatpush2.msra.mxu0 %v102
    %282 = vmatprep.subr.mxu0 %v101
    %283 = vmatpush2.msra.mxu0 %v100
    %284 = vmatprep.subr.mxu0 %v99
    %285 = vmatpush2.msra.mxu0 %v98
    %286 = vmatprep.subr.mxu0 %v97
    %287 = vmatpush2.msra.mxu0 %v96
    %288 = vmatprep.subr.mxu0 %v95
    %289 = vmatpush2.msra.mxu0 %v94
    %290 = vmatprep.mubr.f32.mxu0 %v214
    %291 = vmatmul.mubr.f32.gmra.mxu0 %v213
    %v292 = vpop.f32.mrf.mxu0
    %v293 = vadd.f32 %v219, %v292
    %v294 = vpop.f32.mrf.mxu0
    %v295 = vadd.f32 %v223, %v294
    %296 = vdwg.mxu0
    %v297 = vmax.f32 %v293, 0.0
    %v298 = vmax.f32 %v295, 0.0
    %v299 = vld [vmem:[%s5] sm:$0xff]
    %v300 = vld [vmem:[%s5 + $0x8] sm:$0xff]
    %v301 = vld [vmem:[%s5 + $0x10] sm:$0xff]
    %v302 = vld [vmem:[%s5 + $0x18] sm:$0xff]
    %v303 = vld [vmem:[%s5 + $0x20] sm:$0xff]
    %v304 = vld [vmem:[%s5 + $0x28] sm:$0xff]
    %v305 = vld [vmem:[%s5 + $0x30] sm:$0xff]
    %v306 = vld [vmem:[%s5 + $0x38] sm:$0xff]
    %v307 = vld [vmem:[%s5 + $0x40] sm:$0xff]
    %v308 = vld [vmem:[%s5 + $0x48] sm:$0xff]
    %v309 = vld [vmem:[%s5 + $0x50] sm:$0xff]
    %v310 = vld [vmem:[%s5 + $0x58] sm:$0xff]
    %v311 = vld [vmem:[%s5 + $0x60] sm:$0xff]
    %v312 = vld [vmem:[%s5 + $0x68] sm:$0xff]
    %v313 = vld [vmem:[%s5 + $0x70] sm:$0xff]
    %v314 = vld [vmem:[%s5 + $0x78] sm:$0xff]
    %v315 = vld [vmem:[%s5 + $0x80] sm:$0xff]
    %v316 = vld [vmem:[%s5 + $0x88] sm:$0xff]
    %v317 = vld [vmem:[%s5 + $0x90] sm:$0xff]
    %v318 = vld [vmem:[%s5 + $0x98] sm:$0xff]
    %v319 = vld [vmem:[%s5 + $0xa0] sm:$0xff]
    %v320 = vld [vmem:[%s5 + $0xa8] sm:$0xff]
    %v321 = vld [vmem:[%s5 + $0xb0] sm:$0xff]
    %v322 = vld [vmem:[%s5 + $0xb8] sm:$0xff]
    %v323 = vld [vmem:[%s5 + $0xc0] sm:$0xff]
    %v324 = vld [vmem:[%s5 + $0xc8] sm:$0xff]
    %v325 = vld [vmem:[%s5 + $0xd0] sm:$0xff]
    %v326 = vld [vmem:[%s5 + $0xd8] sm:$0xff]
    %v327 = vld [vmem:[%s5 + $0xe0] sm:$0xff]
    %v328 = vld [vmem:[%s5 + $0xe8] sm:$0xff]
    %v329 = vld [vmem:[%s5 + $0xf0] sm:$0xff]
    %v330 = vld [vmem:[%s5 + $0xf8] sm:$0xff]
    %v331 = vld [vmem:[%s6] sm:$0x1]
    %v333 = vlaneseq
    %v334 = vshrl.u32 %v333, 7
    %v335 = vsub.s32 0, %v334
    %v336 = vrot.slane %v331, %v335
    %338 = vmatprep.subr.mxu0 0.0
    %339 = vmatpush1.msra.mxu0 %v314
    %340 = vmatprep.subr.mxu0 0.0
    %341 = vmatpush1.msra.mxu0 %v313
    %342 = vmatprep.subr.mxu0 0.0
    %343 = vmatpush1.msra.mxu0 %v312
    %344 = vmatprep.subr.mxu0 0.0
    %345 = vmatpush1.msra.mxu0 %v311
    %346 = vmatprep.subr.mxu0 0.0
    %347 = vmatpush1.msra.mxu0 %v310
    %348 = vmatprep.subr.mxu0 0.0
    %349 = vmatpush1.msra.mxu0 %v309
    %350 = vmatprep.subr.mxu0 0.0
    %351 = vmatpush1.msra.mxu0 %v308
    %352 = vmatprep.subr.mxu0 0.0
    %353 = vmatpush1.msra.mxu0 %v307
    %354 = vmatprep.subr.mxu0 0.0
    %355 = vmatpush1.msra.mxu0 %v306
    %356 = vmatprep.subr.mxu0 0.0
    %357 = vmatpush1.msra.mxu0 %v305
    %358 = vmatprep.subr.mxu0 0.0
    %359 = vmatpush1.msra.mxu0 %v304
    %360 = vmatprep.subr.mxu0 0.0
    %361 = vmatpush1.msra.mxu0 %v303
    %362 = vmatprep.subr.mxu0 0.0
    %363 = vmatpush1.msra.mxu0 %v302
    %364 = vmatprep.subr.mxu0 0.0
    %365 = vmatpush1.msra.mxu0 %v301
    %366 = vmatprep.subr.mxu0 0.0
    %367 = vmatpush1.msra.mxu0 %v300
    %368 = vmatprep.subr.mxu0 0.0
    %369 = vmatpush1.msra.mxu0 %v299
    %370 = vmatprep.subr.mxu0 0.0
    %371 = vmatpush2.msra.mxu0 %v330
    %372 = vmatprep.subr.mxu0 0.0
    %373 = vmatpush2.msra.mxu0 %v329
    %374 = vmatprep.subr.mxu0 0.0
    %375 = vmatpush2.msra.mxu0 %v328
    %376 = vmatprep.subr.mxu0 0.0
    %377 = vmatpush2.msra.mxu0 %v327
    %378 = vmatprep.subr.mxu0 0.0
    %379 = vmatpush2.msra.mxu0 %v326
    %380 = vmatprep.subr.mxu0 0.0
    %381 = vmatpush2.msra.mxu0 %v325
    %382 = vmatprep.subr.mxu0 0.0
    %383 = vmatpush2.msra.mxu0 %v324
    %384 = vmatprep.subr.mxu0 0.0
    %385 = vmatpush2.msra.mxu0 %v323
    %386 = vmatprep.subr.mxu0 0.0
    %387 = vmatpush2.msra.mxu0 %v322
    %388 = vmatprep.subr.mxu0 0.0
    %389 = vmatpush2.msra.mxu0 %v321
    %390 = vmatprep.subr.mxu0 0.0
    %391 = vmatpush2.msra.mxu0 %v320
    %392 = vmatprep.subr.mxu0 0.0
    %393 = vmatpush2.msra.mxu0 %v319
    %394 = vmatprep.subr.mxu0 0.0
    %395 = vmatpush2.msra.mxu0 %v318
    %396 = vmatprep.subr.mxu0 0.0
    %397 = vmatpush2.msra.mxu0 %v317
    %398 = vmatprep.subr.mxu0 0.0
    %399 = vmatpush2.msra.mxu0 %v316
    %400 = vmatprep.subr.mxu0 0.0
    %401 = vmatpush2.msra.mxu0 %v315
    %402 = vmatprep.mubr.f32.mxu0 %v298
    %403 = vmatmul.mubr.f32.gmra.mxu0 %v297
    %v404 = vpop.f32.mrf.mxu0
    %v405 = vadd.f32 %v336, %v404
    %v406 = vpop.f32.mrf.mxu0
    %407 = vdwg.mxu0
    %v408 = vld [vmem:[%s7] sm:$0xff]
    %v409 = vld [vmem:[%s7 + $0x8] sm:$0xff]
    %v410 = vld [vmem:[%s7 + $0x10] sm:$0xff]
    %v411 = vld [vmem:[%s7 + $0x18] sm:$0xff]
    %v412 = vld [vmem:[%s7 + $0x20] sm:$0xff]
    %v413 = vld [vmem:[%s7 + $0x28] sm:$0xff]
    %v414 = vld [vmem:[%s7 + $0x30] sm:$0xff]
    %v415 = vld [vmem:[%s7 + $0x38] sm:$0xff]
    %v416 = vld [vmem:[%s7 + $0x40] sm:$0xff]
    %v417 = vld [vmem:[%s7 + $0x48] sm:$0xff]
    %v418 = vld [vmem:[%s7 + $0x50] sm:$0xff]
    %v419 = vld [vmem:[%s7 + $0x58] sm:$0xff]
    %v420 = vld [vmem:[%s7 + $0x60] sm:$0xff]
    %v421 = vld [vmem:[%s7 + $0x68] sm:$0xff]
    %v422 = vld [vmem:[%s7 + $0x70] sm:$0xff]
    %v423 = vld [vmem:[%s7 + $0x78] sm:$0xff]
    %v424 = vld [vmem:[%s7 + $0x80] sm:$0xff]
    %v425 = vld [vmem:[%s7 + $0x88] sm:$0xff]
    %v426 = vld [vmem:[%s7 + $0x90] sm:$0xff]
    %v427 = vld [vmem:[%s7 + $0x98] sm:$0xff]
    %v428 = vld [vmem:[%s7 + $0xa0] sm:$0xff]
    %v429 = vld [vmem:[%s7 + $0xa8] sm:$0xff]
    %v430 = vld [vmem:[%s7 + $0xb0] sm:$0xff]
    %v431 = vld [vmem:[%s7 + $0xb8] sm:$0xff]
    %v432 = vld [vmem:[%s7 + $0xc0] sm:$0xff]
    %v433 = vld [vmem:[%s7 + $0xc8] sm:$0xff]
    %v434 = vld [vmem:[%s7 + $0xd0] sm:$0xff]
    %v435 = vld [vmem:[%s7 + $0xd8] sm:$0xff]
    %v436 = vld [vmem:[%s7 + $0xe0] sm:$0xff]
    %v437 = vld [vmem:[%s7 + $0xe8] sm:$0xff]
    %v438 = vld [vmem:[%s7 + $0xf0] sm:$0xff]
    %v439 = vld [vmem:[%s7 + $0xf8] sm:$0xff]
    %v440 = vld [vmem:[%s8] sm:$0x1]
    %v442 = vlaneseq
    %v443 = vshrl.u32 %v442, 7
    %v444 = vsub.s32 0, %v443
    %v445 = vrot.slane %v440, %v444
    %447 = vmatprep.subr.mxu0 0.0
    %448 = vmatpush1.msra.mxu0 %v423
    %449 = vmatprep.subr.mxu0 0.0
    %450 = vmatpush1.msra.mxu0 %v422
    %451 = vmatprep.subr.mxu0 0.0
    %452 = vmatpush1.msra.mxu0 %v421
    %453 = vmatprep.subr.mxu0 0.0
    %454 = vmatpush1.msra.mxu0 %v420
    %455 = vmatprep.subr.mxu0 0.0
    %456 = vmatpush1.msra.mxu0 %v419
    %457 = vmatprep.subr.mxu0 0.0
    %458 = vmatpush1.msra.mxu0 %v418
    %459 = vmatprep.subr.mxu0 0.0
    %460 = vmatpush1.msra.mxu0 %v417
    %461 = vmatprep.subr.mxu0 0.0
    %462 = vmatpush1.msra.mxu0 %v416
    %463 = vmatprep.subr.mxu0 0.0
    %464 = vmatpush1.msra.mxu0 %v415
    %465 = vmatprep.subr.mxu0 0.0
    %466 = vmatpush1.msra.mxu0 %v414
    %467 = vmatprep.subr.mxu0 0.0
    %468 = vmatpush1.msra.mxu0 %v413
    %469 = vmatprep.subr.mxu0 0.0
    %470 = vmatpush1.msra.mxu0 %v412
    %471 = vmatprep.subr.mxu0 0.0
    %472 = vmatpush1.msra.mxu0 %v411
    %473 = vmatprep.subr.mxu0 0.0
    %474 = vmatpush1.msra.mxu0 %v410
    %475 = vmatprep.subr.mxu0 0.0
    %476 = vmatpush1.msra.mxu0 %v409
    %477 = vmatprep.subr.mxu0 0.0
    %478 = vmatpush1.msra.mxu0 %v408
    %479 = vmatprep.subr.mxu0 0.0
    %480 = vmatpush2.msra.mxu0 %v439
    %481 = vmatprep.subr.mxu0 0.0
    %482 = vmatpush2.msra.mxu0 %v438
    %483 = vmatprep.subr.mxu0 0.0
    %484 = vmatpush2.msra.mxu0 %v437
    %485 = vmatprep.subr.mxu0 0.0
    %486 = vmatpush2.msra.mxu0 %v436
    %487 = vmatprep.subr.mxu0 0.0
    %488 = vmatpush2.msra.mxu0 %v435
    %489 = vmatprep.subr.mxu0 0.0
    %490 = vmatpush2.msra.mxu0 %v434
    %491 = vmatprep.subr.mxu0 0.0
    %492 = vmatpush2.msra.mxu0 %v433
    %493 = vmatprep.subr.mxu0 0.0
    %494 = vmatpush2.msra.mxu0 %v432
    %495 = vmatprep.subr.mxu0 0.0
    %496 = vmatpush2.msra.mxu0 %v431
    %497 = vmatprep.subr.mxu0 0.0
    %498 = vmatpush2.msra.mxu0 %v430
    %499 = vmatprep.subr.mxu0 0.0
    %500 = vmatpush2.msra.mxu0 %v429
    %501 = vmatprep.subr.mxu0 0.0
    %502 = vmatpush2.msra.mxu0 %v428
    %503 = vmatprep.subr.mxu0 0.0
    %504 = vmatpush2.msra.mxu0 %v427
    %505 = vmatprep.subr.mxu0 0.0
    %506 = vmatpush2.msra.mxu0 %v426
    %507 = vmatprep.subr.mxu0 0.0
    %508 = vmatpush2.msra.mxu0 %v425
    %509 = vmatprep.subr.mxu0 0.0
    %510 = vmatpush2.msra.mxu0 %v424
    %511 = vmatprep.mubr.f32.mxu0 %v298
    %512 = vmatmul.mubr.f32.gmra.mxu0 %v297
    %v513 = vpop.f32.mrf.mxu0
    %v514 = vadd.f32 %v445, %v513
    %v515 = vpop.f32.mrf.mxu0
    %516 = vdwg.mxu0
    %v517 = vsub.f32 2.0, %v514
    %v518 = vmax.f32 %v517, 0.0
    %v519 = vand.u32 2147483647, %v517
    %v520 = vsub.f32 0.0, %v519
    %v521 = vmul.f32 %v520, 1.442695
    %v522 = vpow.pop %v521
    %v523 = vadd.f32 %v522, 1.0
    %v524 = vlog2.pop %v523
    %v525 = vmul.f32 %v524, 0.6931472
    %v526 = vmul.f32 -0.5, %v522
    %v527 = vadd.f32 %v526, 1.0
    %v528 = vmul.f32 %v527, %v522
    %v529 = vand.u32 2147483647, %v522
    %vm530 = vcmp.lt.f32.partialorder %v529, 0.0004427343
    %v531 = vsel %vm530, %v528, %v525
    %v532 = vadd.f32 %v518, %v531
    %v533 = vsub.f32 2.0, %v532
    %v534 = vsub.f32 %v533, -20.0
    %v535 = vmax.f32 %v534, 0.0
    %v536 = vand.u32 2147483647, %v534
    %v537 = vsub.f32 0.0, %v536
    %v538 = vmul.f32 %v537, 1.442695
    %v539 = vpow.pop %v538
    %v540 = vadd.f32 %v539, 1.0
    %v541 = vlog2.pop %v540
    %v542 = vmul.f32 %v541, 0.6931472
    %v543 = vmul.f32 -0.5, %v539
    %v544 = vadd.f32 %v543, 1.0
    %v545 = vmul.f32 %v544, %v539
    %v546 = vand.u32 2147483647, %v539
    %vm547 = vcmp.lt.f32.partialorder %v546, 0.0004427343
    %v548 = vsel %vm547, %v545, %v542
    %v549 = vadd.f32 %v535, %v548
    %v550 = vadd.f32 %v549, -20.0
    %v551 = vmul.f32 %v550, 1.442695
    %v552 = vpow.pop %v551
    %v553 = vld [vmem:[%s9] sm:$0xf]
    %v554 = vmul.f32 %v552, %v553
    %v555 = vadd.f32 %v405, %v554
    %v556 = vtanh.pop %v555
    %vm557 = vcmask 60416
    %558 = vst.msk [vmem:[#allocation5] sm:$0xf] %vm557, %v556
    %v559 = vmul.f32 %v553, -0.5
    %v560 = vmul.f32 %v559, %v553
    %v561 = vsub.f32 %v560, %v550
    %v562 = vsub.f32 %v561, 0.9189385
    %v563 = vmul.f32 %v556, %v556
    %v564 = vsub.f32 1.0, %v563
    %v565 = vadd.f32 %v564, 1e-06
    %v566 = vlog2.pop %v565
    %v567 = vmul.f32 %v566, 0.6931472
    %v568 = vsub.f32 %v562, %v567
    %v569 = vsel %vm557, %v568, 0.0
    %570 = vadd.xlane.f32.xlu0 %v569
    %v571 = vpop.xlane.xlu0 %570
    %vm572 = vcmask 3072
    %573 = vst.msk [vmem:[%s11] sm:$0xf] %vm572, %v571
    // Predicated region
    $region46: #{tpu_custom_call.1} parent=1 // pred_check
      _
    $region47: #{tpu_custom_call.1} parent=1 // pred_check_branch
      %575 = sbr.rel (0) target = $region49
    $region48: #{tpu_custom_call.1} parent=1 // pred_region
      %s577 = ssub.s32 64, 64
      %578 = vsyncadd [#allocation4], %s577
      %s580 = sshll.u32 [#allocation5], 4
      %s581 = int_to_ptr.vmem [resolvable:$true] %s580
      %583 = dma.vmem_to_hbm [thread:$0]  %s581, 64, %s10, [#allocation4]
    $region49: #{tpu_custom_call.1} parent=1 // pred_fallthru
      _
    // Predicated region
    $region50: #{tpu_custom_call.1} parent=1 // pred_check
      _
    $region51: #{tpu_custom_call.1} parent=1 // pred_check_branch
      %585 = sbr.rel (0) target = $region53
    $region52: #{tpu_custom_call.1} parent=1 // pred_region
      _
    $region53: #{tpu_custom_call.1} parent=1 // pred_fallthru
      _
    // Predicated region
    $region54: #{tpu_custom_call.1} parent=1 // pred_check
      _
    $region55: #{tpu_custom_call.1} parent=1 // pred_check_branch
      %587 = sbr.rel (0) target = $region57
    $region56: #{tpu_custom_call.1} parent=1 // pred_region
      %588 = dma.done [#allocation4], 64
    $region57: #{tpu_custom_call.1} parent=1 // pred_fallthru
      _
    // Predicated region
    $region58: #{tpu_custom_call.1} parent=1 // pred_check
      _
    $region59: #{tpu_custom_call.1} parent=1 // pred_check_branch
      %590 = sbr.rel (0) target = $region61
    $region60: #{tpu_custom_call.1} parent=1 // pred_region
      _
    $region61: #{tpu_custom_call.1} parent=1 // pred_fallthru
      _
    %591 = vsyncpa [#allocation3], 1
    %592 = vsyncpa [#allocation4], 1

</llo_original>
